<compile_context>
chip_gen: v5e
topology: v5e:2x2
jax: 0.10.0
libtpu: 0.0.40
codegen_flags: <defaults>
</compile_context>

<pallas_src>
import functools

import jax
import jax.numpy as jnp
from jax import lax
from jax.experimental import pallas as pl
from jax.experimental.pallas import tpu as pltpu

GAMMA = 2.0   # hps.loss_beta (deterministic, set in-script)
LANES = 128
SUBLANES = 8


def _focal_pow(x, gamma):
    """(1 - pt) ** gamma without the exp/log EUP path when possible."""
    g = float(gamma)
    if g == 2.0:
        return x * x
    if g == int(g) and 0 <= int(g) <= 16:
        return lax.integer_pow(x, int(g))
    return jnp.power(x, g)   # general float exponent: falls back to exp/log


def focal_loss_kernel(p0_ref, p1_ref, lab_ref, out_ref, *, gamma):
    # Grid = (cores, blocks_per_core). The output block for a given core index is
    # resident across the inner ("arbitrary") axis, so it doubles as accumulator.
    i = pl.program_id(1)

    @pl.when(i == 0)
    def _():
        out_ref[...] = jnp.zeros_like(out_ref)

    p0 = p0_ref[...].astype(jnp.float32)     # (T, 128)
    p1 = p1_ref[...].astype(jnp.float32)     # (T, 128)
    lab = lab_ref[...]                       # (T, 128) int32

    is_zero = lab == 0
    # torch.gather(predict, 1, labels) with 2 classes:
    pt = jnp.where(is_zero, p0, p1)
    # alpha = where(labels == 0, 0.9, 0.1)
    alpha = jnp.where(is_zero, jnp.float32(0.9), jnp.float32(0.1))

    # Padded elements were constructed with pt == 1.0 and label == 0, so their
    # contribution is exactly 0:  -0.9 * 0**gamma * log(1) == 0.
    loss = -alpha * _focal_pow(1.0 - pt, gamma) * jnp.log(pt)   # (T, 128)

    rows = loss.shape[0]
    # VPU-only partial reduction to a lane-dense (8, 128) slab; the single
    # cross-lane/sublane reduce to a scalar happens once in the wrapper.
    partial = loss.reshape(rows // SUBLANES, SUBLANES, LANES).sum(axis=0)
    out_ref[...] += partial[None]


def focal_loss(predict, labels, gamma=GAMMA, block_rows=2048):
    """predict: [N, 2] float, labels: [N, 1] or [N] int -> scalar f32."""
    N, C = predict.shape
    assert C == 2
    labels = labels.reshape(N)

    # Lane-dense relayout + padding so block shapes are free of N's factorization.
    rows_needed = pl.cdiv(N, LANES)
    block_rows = int(min(block_rows,
                         max(SUBLANES, pl.cdiv(rows_needed, SUBLANES) * SUBLANES)))
    rows = pl.cdiv(rows_needed, block_rows) * block_rows
    pad = rows * LANES - N

    # Pad with pt = 1.0 (p0 = p1 = 1.0) and label = 0 -> padded loss is exactly 0.
    # TODO(synk): if the producer can emit int8 labels / pre-split p0,p1, do it
    # there to cut HBM traffic further; here labels stay int32 as in the spec.
    p0 = jnp.pad(predict[:, 0], (0, pad), constant_values=1.0).reshape(rows, LANES)
    p1 = jnp.pad(predict[:, 1], (0, pad), constant_values=1.0).reshape(rows, LANES)
    lab = jnp.pad(labels, (0, pad), constant_values=0).reshape(rows, LANES)

    n_blocks = rows // block_rows
    # Outer parallel axis so v7x megacore can use both TensorCores; harmless on
    # single-TC chips (v5e/v6e).
    num_cores = 2 if (n_blocks >= 2 and n_blocks % 2 == 0) else 1
    blocks_per_core = n_blocks // num_cores

    in_map = lambda c, i: (c * blocks_per_core + i, 0)
    kernel = functools.partial(focal_loss_kernel, gamma=gamma)

    partials = pl.pallas_call(
        kernel,
        out_shape=jax.ShapeDtypeStruct((num_cores, SUBLANES, LANES), jnp.float32),
        grid_spec=pltpu.PrefetchScalarGridSpec(
            num_scalar_prefetch=0,
            grid=(num_cores, blocks_per_core),
            in_specs=[
                pl.BlockSpec((block_rows, LANES), in_map),
                pl.BlockSpec((block_rows, LANES), in_map),
                pl.BlockSpec((block_rows, LANES), in_map),
            ],
            out_specs=pl.BlockSpec((1, SUBLANES, LANES), lambda c, i: (c, 0, 0)),
        ),
        compiler_params=pltpu.CompilerParams(
            dimension_semantics=("parallel", "arbitrary"),
        ),
    )(p0, p1, lab)

    # Single final cross-lane/sublane reduce + mean.
    return jnp.sum(partials) / jnp.float32(N)


def focal_loss_ref(predict, labels, gamma=GAMMA):
    pt = jnp.take_along_axis(predict, labels, axis=1)
    alpha = jnp.where(labels == 0, 0.9, 0.1).astype(jnp.float32)
    return jnp.mean(-alpha * jnp.power(1.0 - pt, gamma) * jnp.log(pt))


if __name__ == "__main__":
    # batch_size=2, sent_num=8 -> N = 2*8*8 = 128 samples, 2 classes.
    key = jax.random.PRNGKey(0)
    k1, k2 = jax.random.split(key)
    N = 2 * 8 * 8

    logits = jax.random.normal(k1, (N, 2), dtype=jnp.float32)
    predict = jax.nn.softmax(logits, axis=-1)                    # probabilities in (0, 1)
    labels = jax.random.randint(k2, (N, 1), 0, 2, dtype=jnp.int32)

    out = jax.block_until_ready(focal_loss(predict, labels))
    ref = focal_loss_ref(predict, labels)
    assert jnp.allclose(out, ref, rtol=1e-5, atol=1e-6), (out, ref)

    print("KERNEL_OK")
</pallas_src>

<mosaic_0001>
module attributes {stable_mosaic.version = 11 : i64} {
  func.func @focal_loss_kernel(%arg0: i32, %arg1: i32, %arg2: memref<8x128xf32, #tpu.memory_space<vmem>>, %arg3: memref<8x128xf32, #tpu.memory_space<vmem>>, %arg4: memref<8x128xi32, #tpu.memory_space<vmem>>, %arg5: memref<1x8x128xf32, #tpu.memory_space<vmem>>) attributes {dimension_semantics = [#tpu.dimension_semantics<parallel>, #tpu.dimension_semantics<arbitrary>], iteration_bounds = array<i64: 1, 1>, scalar_prefetch = 0 : i64, scratch_operands = 0 : i64, tpu.core_type = #tpu.core_type<tc>, window_params = [{transform_indices = @transform_0, window_bounds = array<i64: 8, 128>}, {transform_indices = @transform_1, window_bounds = array<i64: 8, 128>}, {transform_indices = @transform_2, window_bounds = array<i64: 8, 128>}, {transform_indices = @transform_3, window_bounds = array<i64: 1, 8, 128>}]} {
    %c0_i32 = arith.constant 0 : i32
    %0 = arith.cmpi eq, %arg1, %c0_i32 : i32
    %1 = arith.extui %0 : i1 to i32
    %c0_i32_0 = arith.constant 0 : i32
    %2 = arith.cmpi ne, %1, %c0_i32_0 : i32
    scf.if %2 {
      %cst_17 = arith.constant 0.000000e+00 : f32
      %26 = vector.broadcast %cst_17 : f32 to vector<1x8x128xf32>
      %c0_18 = arith.constant 0 : index
      %c0_19 = arith.constant 0 : index
      %c0_20 = arith.constant 0 : index
      %27 = vector.load %arg5[%c0_18, %c0_19, %c0_20] : memref<1x8x128xf32, #tpu.memory_space<vmem>>, vector<1x8x128xf32>
      tpu.vector_store %arg5[%c0_18, %c0_19, %c0_20], %26 {strides = array<i32>} : memref<1x8x128xf32, #tpu.memory_space<vmem>>, vector<1x8x128xf32>,
    } else {
    }
    %c0 = arith.constant 0 : index
    %c0_1 = arith.constant 0 : index
    %3 = vector.load %arg2[%c0, %c0_1] : memref<8x128xf32, #tpu.memory_space<vmem>>, vector<8x128xf32>
    %c0_2 = arith.constant 0 : index
    %c0_3 = arith.constant 0 : index
    %4 = vector.load %arg3[%c0_2, %c0_3] : memref<8x128xf32, #tpu.memory_space<vmem>>, vector<8x128xf32>
    %c0_4 = arith.constant 0 : index
    %c0_5 = arith.constant 0 : index
    %5 = vector.load %arg4[%c0_4, %c0_5] : memref<8x128xi32, #tpu.memory_space<vmem>>, vector<8x128xi32>
    %c0_i32_6 = arith.constant 0 : i32
    %6 = vector.broadcast %c0_i32_6 : i32 to vector<8x128xi32>
    %7 = arith.cmpi eq, %5, %6 : vector<8x128xi32>
    %8 = arith.select %7, %3, %4 : vector<8x128xi1>, vector<8x128xf32>
    %cst = arith.constant 0.899999976 : f32
    %cst_7 = arith.constant 1.000000e-01 : f32
    %9 = vector.broadcast %cst : f32 to vector<8x128xf32>
    %10 = vector.broadcast %cst_7 : f32 to vector<8x128xf32>
    %11 = arith.select %7, %9, %10 : vector<8x128xi1>, vector<8x128xf32>
    %cst_8 = arith.constant 0.000000e+00 : f32
    %12 = vector.broadcast %cst_8 : f32 to vector<8x128xf32>
    %13 = arith.subf %12, %11 : vector<8x128xf32>
    %cst_9 = arith.constant 1.000000e+00 : f32
    %14 = vector.broadcast %cst_9 : f32 to vector<8x128xf32>
    %15 = arith.subf %14, %8 : vector<8x128xf32>
    %16 = arith.mulf %15, %15 : vector<8x128xf32>
    %17 = arith.mulf %13, %16 : vector<8x128xf32>
    %18 = math.log %8 : vector<8x128xf32>
    %19 = arith.mulf %17, %18 : vector<8x128xf32>
    %20 = vector.shape_cast %19 : vector<8x128xf32> to vector<1x8x128xf32>
    %cst_10 = arith.constant dense<0.000000e+00> : vector<8x128xf32>
    %21 = vector.multi_reduction <add>, %20, %cst_10 [0] : vector<1x8x128xf32> to vector<8x128xf32>
    %c0_11 = arith.constant 0 : index
    %c0_12 = arith.constant 0 : index
    %c0_13 = arith.constant 0 : index
    %22 = vector.load %arg5[%c0_11, %c0_12, %c0_13] : memref<1x8x128xf32, #tpu.memory_space<vmem>>, vector<1x8x128xf32>
    %23 = vector.shape_cast %21 : vector<8x128xf32> to vector<1x8x128xf32>
    %24 = arith.addf %22, %23 : vector<1x8x128xf32>
    %c0_14 = arith.constant 0 : index
    %c0_15 = arith.constant 0 : index
    %c0_16 = arith.constant 0 : index
    %25 = vector.load %arg5[%c0_14, %c0_15, %c0_16] : memref<1x8x128xf32, #tpu.memory_space<vmem>>, vector<1x8x128xf32>
    tpu.vector_store %arg5[%c0_14, %c0_15, %c0_16], %24 {strides = array<i32>} : memref<1x8x128xf32, #tpu.memory_space<vmem>>, vector<1x8x128xf32>,
    return
  }
  func.func @transform_0(%arg0: i32, %arg1: i32) -> (i32, i32) {
    %c1_i32 = arith.constant 1 : i32
    %0 = arith.muli %arg0, %c1_i32 : i32
    %1 = arith.addi %0, %arg1 : i32
    %c0_i32 = arith.constant 0 : i32
    %c0_i32_0 = arith.constant 0 : i32
    return %1, %c0_i32 : i32, i32
  }
  func.func @transform_1(%arg0: i32, %arg1: i32) -> (i32, i32) {
    %c1_i32 = arith.constant 1 : i32
    %0 = arith.muli %arg0, %c1_i32 : i32
    %1 = arith.addi %0, %arg1 : i32
    %c0_i32 = arith.constant 0 : i32
    %c0_i32_0 = arith.constant 0 : i32
    return %1, %c0_i32 : i32, i32
  }
  func.func @transform_2(%arg0: i32, %arg1: i32) -> (i32, i32) {
    %c1_i32 = arith.constant 1 : i32
    %0 = arith.muli %arg0, %c1_i32 : i32
    %1 = arith.addi %0, %arg1 : i32
    %c0_i32 = arith.constant 0 : i32
    %c0_i32_0 = arith.constant 0 : i32
    return %1, %c0_i32 : i32, i32
  }
  func.func @transform_3(%arg0: i32, %arg1: i32) -> (i32, i32, i32) {
    %c0_i32 = arith.constant 0 : i32
    %c0_i32_0 = arith.constant 0 : i32
    %c0_i32_1 = arith.constant 0 : i32
    return %arg0, %c0_i32, %c0_i32_0 : i32, i32, i32
  }
}

</mosaic_0001>

<llo_original>
// kernel: tpu_custom_call.1
$region0: #{tpu_custom_call.1}
  #allocation0 [shape = 'u32[]', space=smem, size = 0x4, offset = 0x4, fixed_abs, tag = 'smem constant byte address 0x4 - core index']
  #allocation1 [shape = 'u32[72,128]{1,0:T(1,128)}', space=vmem, size = 0x9000, scoped, tag = 'internal scratch']
  %s0 = inlined_call_operand.hbm [shape: f32[8,128], index: 0, kind: input, shape index: {}]
  %s1 = inlined_call_operand.hbm [shape: f32[8,128], index: 1, kind: input, shape index: {}]
  %s2 = inlined_call_operand.hbm [shape: s32[8,128], index: 2, kind: input, shape index: {}]
  %s3 = inlined_call_operand.hbm [shape: f32[1,8,128], index: 3, kind: output, shape index: {}]
  %s4 = sld [smem:[#allocation0]]
  $region38: #{tpu_custom_call.1} parent=0
    _
  %s6 = ssub.s32 1, %s4
  %s7 = scalar_select 0, %s6, %s4
  $region1: #{tpu_custom_call.1} parent=0
    #allocation2 [shape = 'u8[4096]{0}', space=vmem, size = 0x1000, scoped, tag = 'input window, operand 0, single buffered']
    #allocation3 [shape = 's32[1]{0}', space=sflag, size = 0x4, scoped, tag = 'scoped memory for tpu_custom_call.1']
    #allocation4 [shape = 's32[1]{0}', space=sflag, size = 0x4, scoped, tag = 'scoped memory for tpu_custom_call.1']
    #allocation5 [shape = 'u8[4096]{0}', space=vmem, size = 0x1000, scoped, tag = 'input window, operand 1, single buffered']
    #allocation6 [shape = 's32[1]{0}', space=sflag, size = 0x4, scoped, tag = 'scoped memory for tpu_custom_call.1']
    #allocation7 [shape = 'u8[4096]{0}', space=vmem, size = 0x1000, scoped, tag = 'input window, operand 2, single buffered']
    #allocation8 [shape = 'u8[4096]{0}', space=vmem, size = 0x1000, scoped, tag = 'output window, operand 0, single buffered']
    %8 = vsyncpa [#allocation3], 0
    %9 = vsyncpa [#allocation6], 0
    %10 = vsyncpa [#allocation4], 0
    // Predicated region
    $region2: #{tpu_custom_call.1} parent=1 // pred_check
      _
    $region3: #{tpu_custom_call.1} parent=1 // pred_check_branch
      %12 = sbr.rel (0) target = $region5
    $region4: #{tpu_custom_call.1} parent=1 // pred_region
      %s13 = sadd.s32 0, 0
      %15 = vsyncadd [#allocation3], 0
      %s16 = smul.addr %s13, 8
      %s17 = scalar_lea.hbm %s0, %s16
      %s19 = sshll.u32 %s17, 4
      %s20 = int_to_ptr.hbm [resolvable:$true] %s19
      %s21 = sshll.u32 [#allocation2], 4
      %s22 = int_to_ptr.vmem [resolvable:$true] %s21
      %24 = dma.hbm_to_vmem [thread:$0]  %s20, 128, %s22, [#allocation3]
    $region5: #{tpu_custom_call.1} parent=1 // pred_fallthru
      _
    // Predicated region
    $region6: #{tpu_custom_call.1} parent=1 // pred_check
      _
    $region7: #{tpu_custom_call.1} parent=1 // pred_check_branch
      %26 = sbr.rel (0) target = $region9
    $region8: #{tpu_custom_call.1} parent=1 // pred_region
      %s27 = sadd.s32 0, 0
      %29 = vsyncadd [#allocation6], 0
      %s30 = smul.addr %s27, 8
      %s31 = scalar_lea.hbm %s1, %s30
      %s33 = sshll.u32 %s31, 4
      %s34 = int_to_ptr.hbm [resolvable:$true] %s33
      %s35 = sshll.u32 [#allocation5], 4
      %s36 = int_to_ptr.vmem [resolvable:$true] %s35
      %38 = dma.hbm_to_vmem [thread:$0]  %s34, 128, %s36, [#allocation6]
    $region9: #{tpu_custom_call.1} parent=1 // pred_fallthru
      _
    // Predicated region
    $region10: #{tpu_custom_call.1} parent=1 // pred_check
      _
    $region11: #{tpu_custom_call.1} parent=1 // pred_check_branch
      %40 = sbr.rel (0) target = $region13
    $region12: #{tpu_custom_call.1} parent=1 // pred_region
      %s41 = sadd.s32 0, 0
      %43 = vsyncadd [#allocation6], 0
      %s44 = smul.addr %s41, 8
      %s45 = scalar_lea.hbm %s2, %s44
      %s47 = sshll.u32 %s45, 4
      %s48 = int_to_ptr.hbm [resolvable:$true] %s47
      %s49 = sshll.u32 [#allocation7], 4
      %s50 = int_to_ptr.vmem [resolvable:$true] %s49
      %52 = dma.hbm_to_vmem [thread:$0]  %s48, 128, %s50, [#allocation6]
    $region13: #{tpu_custom_call.1} parent=1 // pred_fallthru
      _
    // Predicated region
    $region14: #{tpu_custom_call.1} parent=1 // pred_check
      _
    $region15: #{tpu_custom_call.1} parent=1 // pred_check_branch
      %54 = sbr.rel (0) target = $region17
    $region16: #{tpu_custom_call.1} parent=1 // pred_region
      %56 = dma.done [#allocation3], 128
    $region17: #{tpu_custom_call.1} parent=1 // pred_fallthru
      _
    // Predicated region
    $region18: #{tpu_custom_call.1} parent=1 // pred_check
      _
    $region19: #{tpu_custom_call.1} parent=1 // pred_check_branch
      %58 = sbr.rel (0) target = $region21
    $region20: #{tpu_custom_call.1} parent=1 // pred_region
      %60 = dma.done [#allocation6], 128
    $region21: #{tpu_custom_call.1} parent=1 // pred_fallthru
      _
    // Predicated region
    $region22: #{tpu_custom_call.1} parent=1 // pred_check
      _
    $region23: #{tpu_custom_call.1} parent=1 // pred_check_branch
      %62 = sbr.rel (0) target = $region25
    $region24: #{tpu_custom_call.1} parent=1 // pred_region
      %64 = dma.done [#allocation6], 128
    $region25: #{tpu_custom_call.1} parent=1 // pred_fallthru
      _
    %s65 = sadd.s32 0, 0
    %s66 = sadd.s32 0, 0
    %s67 = sadd.s32 0, 0
    %p68 = scmp.eq.s32.totalorder 0, 0
    // Predicated region
    $region26: #{tpu_custom_call.1} parent=1 // pred_check
      %p69 = pneg %p68
    $region27: #{tpu_custom_call.1} parent=1 // pred_check_branch
      %71 = sbr.rel (%p69) target = $region29
    $region28: #{tpu_custom_call.1} parent=1 // pred_region
      %72 = vst [vmem:[#allocation8] sm:$0xff] 0.0
    $region29: #{tpu_custom_call.1} parent=1 // pred_fallthru
      _
    %v73 = vld [vmem:[#allocation2] sm:$0xff]
    %v74 = vld [vmem:[#allocation5] sm:$0xff]
    %v75 = vld [vmem:[#allocation7] sm:$0xff]
    %vm76 = vcmp.eq.s32.totalorder %v75, 0
    %v77 = vsel %vm76, %v73, %v74
    %v78 = vsel %vm76, 0.9, 0.1
    %v79 = vsub.f32 0.0, %v78
    %v80 = vsub.f32 1.0, %v77
    %v81 = vmul.f32 %v80, %v80
    %v82 = vmul.f32 %v79, %v81
    %v83 = vlog2.pop %v77
    %v84 = vmul.f32 %v83, 0.6931472
    %v85 = vmul.f32 %v82, %v84
    %v86 = vadd.f32 %v85, 0.0
    %v87 = vld [vmem:[#allocation8] sm:$0xff]
    %v88 = vadd.f32 %v87, %v86
    %89 = vst [vmem:[#allocation8] sm:$0xff] %v88
    // Predicated region
    $region30: #{tpu_custom_call.1} parent=1 // pred_check
      _
    $region31: #{tpu_custom_call.1} parent=1 // pred_check_branch
      %91 = sbr.rel (0) target = $region33
    $region32: #{tpu_custom_call.1} parent=1 // pred_region
      %93 = vsyncadd [#allocation4], 0
      %s95 = sshll.u32 [#allocation8], 4
      %s96 = int_to_ptr.vmem [resolvable:$true] %s95
      %s97 = sshll.u32 %s3, 4
      %s98 = int_to_ptr.hbm [resolvable:$true] %s97
      %100 = dma.vmem_to_hbm [thread:$0]  %s96, 128, %s98, [#allocation4]
    $region33: #{tpu_custom_call.1} parent=1 // pred_fallthru
      _
    // Predicated region
    $region34: #{tpu_custom_call.1} parent=1 // pred_check
      _
    $region35: #{tpu_custom_call.1} parent=1 // pred_check_branch
      %102 = sbr.rel (0) target = $region37
    $region36: #{tpu_custom_call.1} parent=1 // pred_region
      %104 = dma.done [#allocation4], 128
    $region37: #{tpu_custom_call.1} parent=1 // pred_fallthru
      _
    %105 = vsyncpa [#allocation3], 1
    %106 = vsyncpa [#allocation6], 1
    %107 = vsyncpa [#allocation4], 1

</llo_original>
